<compile_context>
chip_gen: v7x
topology: tpu7x:2x2x1
jax: 0.10.0
libtpu: 0.0.40
codegen_flags: <defaults>
</compile_context>

<pallas_src>
import functools

import jax
import jax.numpy as jnp
from jax import lax
from jax.experimental import pallas as pl
from jax.experimental.pallas import tpu as pltpu

_LANE = 128                 # last dim of every block (full lane width)
_TARGET_BLOCK_ROWS = 2048   # 2048 x 128 f32 = 1 MiB per input per grid step


def _bce_kernel(pred_ref, target_ref, out_ref, acc_ref, *,
                n_valid, block_rows, blocks_per_core, needs_mask):
    p_i = pl.program_id(0)   # "parallel" (core) axis
    r_i = pl.program_id(1)   # "arbitrary" (reduction) axis

    # Zero the per-core accumulator at the start of this core's row sweep.
    @pl.when(r_i == 0)
    def _():
        acc_ref[...] = jnp.zeros_like(acc_ref)

    p = pred_ref[...].astype(jnp.float32)
    t = target_ref[...].astype(jnp.float32)

    # PyTorch BCELoss clamps the log terms at -100 for numerical stability.
    log_p = jnp.maximum(jnp.log(p), -100.0)
    log_1mp = jnp.maximum(jnp.log(1.0 - p), -100.0)
    loss = -(t * log_p + (1.0 - t) * log_1mp)

    if needs_mask:
        # Zero out elements past the true element count (padding / ragged last
        # block).  Garbage lanes may have produced NaN above; jnp.where is a
        # select, so they are discarded cleanly.
        blk = p_i * blocks_per_core + r_i
        row = lax.broadcasted_iota(jnp.int32, loss.shape, 0) + blk * block_rows
        col = lax.broadcasted_iota(jnp.int32, loss.shape, 1)
        full_rows = n_valid // _LANE
        rem = n_valid % _LANE
        valid = (row < full_rows) | ((row == full_rows) & (col < rem))
        loss = jnp.where(valid, loss, 0.0)

    # Block-shaped running sum: pure element-wise VPU adds every step, no
    # per-step cross-lane/sublane reduction.
    acc_ref[...] += loss

    # One reduction per core, on its last step: emit a lane-dense (1,128) partial.
    @pl.when(r_i == pl.num_programs(1) - 1)
    def _():
        out_ref[...] = jnp.sum(acc_ref[...], axis=0, keepdims=True)[None]


@jax.jit
def bce_loss(pred, target):
    """Mean binary cross-entropy, matching torch.nn.BCELoss()(pred, target)."""
    n = pred.size
    flat_p = pred.reshape(-1)
    flat_t = target.reshape(-1)

    rows = pl.cdiv(n, _LANE)
    n_pad = rows * _LANE
    if n_pad != n:
        # Rare path (element count not a multiple of 128): pad with zeros; the
        # padded lanes are masked inside the kernel, so the value is irrelevant.
        flat_p = jnp.pad(flat_p, (0, n_pad - n))
        flat_t = jnp.pad(flat_t, (0, n_pad - n))

    # Free reshape for contiguous data: flat -> (rows, 128), sublane/lane dense.
    p2 = flat_p.reshape(rows, _LANE)
    t2 = flat_t.reshape(rows, _LANE)

    block_rows = min(rows, _TARGET_BLOCK_ROWS)
    num_blocks = pl.cdiv(rows, block_rows)

    # Megacore split (v7x has 2 TensorCores): shard row blocks across cores when
    # they divide evenly; otherwise run on a single core.
    n_cores = 2 if (num_blocks % 2 == 0 and num_blocks >= 2) else 1
    blocks_per_core = num_blocks // n_cores

    needs_mask = (num_blocks * block_rows * _LANE) != n

    kernel = functools.partial(
        _bce_kernel,
        n_valid=n,
        block_rows=block_rows,
        blocks_per_core=blocks_per_core,
        needs_mask=needs_mask,
    )

    row_block_idx = lambda p_i, r_i: (p_i * blocks_per_core + r_i, 0)

    partials = pl.pallas_call(
        kernel,
        out_shape=jax.ShapeDtypeStruct((n_cores, 1, _LANE), jnp.float32),
        grid_spec=pltpu.PrefetchScalarGridSpec(
            num_scalar_prefetch=0,
            grid=(n_cores, blocks_per_core),
            in_specs=[
                pl.BlockSpec((block_rows, _LANE), row_block_idx),
                pl.BlockSpec((block_rows, _LANE), row_block_idx),
            ],
            out_specs=pl.BlockSpec((1, 1, _LANE), lambda p_i, r_i: (p_i, 0, 0)),
            scratch_shapes=[pltpu.VMEM((block_rows, _LANE), jnp.float32)],
        ),
        compiler_params=pltpu.CompilerParams(
            dimension_semantics=("parallel", "arbitrary"),
        ),
    )(p2, t2)

    # Tiny final reduction (<= 2*128 elements) + mean division in plain JAX.
    return jnp.sum(partials) / jnp.float32(n)


if __name__ == "__main__":
    key = jax.random.PRNGKey(0)
    k1, k2 = jax.random.split(key)

    B, C, H, W = 2, 4, 16, 16
    # pred must be probabilities in (0, 1); target in [0, 1].
    pred = jax.nn.sigmoid(jax.random.normal(k1, (B, C, H, W), dtype=jnp.float32))
    target = (jax.random.uniform(k2, (B, C, H, W)) > 0.5).astype(jnp.float32)

    out = bce_loss(pred, target)
    out = jax.block_until_ready(out)

    # Reference check (plain JAX, same clamped-log semantics as torch BCELoss).
    p = pred.reshape(B, -1).astype(jnp.float32)
    t = target.reshape(B, -1).astype(jnp.float32)
    ref = jnp.mean(
        -(t * jnp.maximum(jnp.log(p), -100.0)
          + (1.0 - t) * jnp.maximum(jnp.log(1.0 - p), -100.0))
    )
    assert jnp.allclose(out, ref, rtol=1e-5, atol=1e-6), (out, ref)

    print("KERNEL_OK")
</pallas_src>

<mosaic_0001>
module attributes {stable_mosaic.version = 11 : i64} {
  func.func @_bce_kernel(%arg0: i32, %arg1: i32, %arg2: memref<16x128xf32, #tpu.memory_space<vmem>>, %arg3: memref<16x128xf32, #tpu.memory_space<vmem>>, %arg4: memref<1x1x128xf32, #tpu.memory_space<vmem>>, %arg5: memref<16x128xf32, #tpu.memory_space<vmem>>) attributes {dimension_semantics = [#tpu.dimension_semantics<parallel>, #tpu.dimension_semantics<arbitrary>], iteration_bounds = array<i64: 1, 1>, scalar_prefetch = 0 : i64, scratch_operands = 1 : i64, tpu.core_type = #tpu.core_type<tc>, window_params = [{transform_indices = @transform_0, window_bounds = array<i64: 16, 128>}, {transform_indices = @transform_1, window_bounds = array<i64: 16, 128>}, {transform_indices = @transform_2, window_bounds = array<i64: 1, 1, 128>}]} {
    %c0_i32 = arith.constant 0 : i32
    %0 = arith.cmpi eq, %arg1, %c0_i32 : i32
    %1 = arith.extui %0 : i1 to i32
    %c0_i32_0 = arith.constant 0 : i32
    %2 = arith.cmpi ne, %1, %c0_i32_0 : i32
    scf.if %2 {
      %cst_14 = arith.constant 0.000000e+00 : f32
      %26 = vector.broadcast %cst_14 : f32 to vector<16x128xf32>
      %c0_15 = arith.constant 0 : index
      %c0_16 = arith.constant 0 : index
      %27 = vector.load %arg5[%c0_15, %c0_16] : memref<16x128xf32, #tpu.memory_space<vmem>>, vector<16x128xf32>
      tpu.vector_store %arg5[%c0_15, %c0_16], %26 {strides = array<i32>} : memref<16x128xf32, #tpu.memory_space<vmem>>, vector<16x128xf32>,
    } else {
    }
    %c0 = arith.constant 0 : index
    %c0_1 = arith.constant 0 : index
    %3 = vector.load %arg2[%c0, %c0_1] : memref<16x128xf32, #tpu.memory_space<vmem>>, vector<16x128xf32>
    %c0_2 = arith.constant 0 : index
    %c0_3 = arith.constant 0 : index
    %4 = vector.load %arg3[%c0_2, %c0_3] : memref<16x128xf32, #tpu.memory_space<vmem>>, vector<16x128xf32>
    %5 = math.log %3 : vector<16x128xf32>
    %cst = arith.constant -1.000000e+02 : f32
    %6 = vector.broadcast %cst : f32 to vector<16x128xf32>
    %7 = arith.maximumf %5, %6 : vector<16x128xf32>
    %cst_4 = arith.constant 1.000000e+00 : f32
    %8 = vector.broadcast %cst_4 : f32 to vector<16x128xf32>
    %9 = arith.subf %8, %3 : vector<16x128xf32>
    %10 = math.log %9 : vector<16x128xf32>
    %cst_5 = arith.constant -1.000000e+02 : f32
    %11 = vector.broadcast %cst_5 : f32 to vector<16x128xf32>
    %12 = arith.maximumf %10, %11 : vector<16x128xf32>
    %13 = arith.mulf %4, %7 : vector<16x128xf32>
    %cst_6 = arith.constant 1.000000e+00 : f32
    %14 = vector.broadcast %cst_6 : f32 to vector<16x128xf32>
    %15 = arith.subf %14, %4 : vector<16x128xf32>
    %16 = arith.mulf %15, %12 : vector<16x128xf32>
    %17 = arith.addf %13, %16 : vector<16x128xf32>
    %cst_7 = arith.constant 0.000000e+00 : f32
    %18 = vector.broadcast %cst_7 : f32 to vector<16x128xf32>
    %19 = arith.subf %18, %17 : vector<16x128xf32>
    %c0_8 = arith.constant 0 : index
    %c0_9 = arith.constant 0 : index
    %20 = vector.load %arg5[%c0_8, %c0_9] : memref<16x128xf32, #tpu.memory_space<vmem>>, vector<16x128xf32>
    %21 = arith.addf %20, %19 : vector<16x128xf32>
    %c0_10 = arith.constant 0 : index
    %c0_11 = arith.constant 0 : index
    %22 = vector.load %arg5[%c0_10, %c0_11] : memref<16x128xf32, #tpu.memory_space<vmem>>, vector<16x128xf32>
    tpu.vector_store %arg5[%c0_10, %c0_11], %21 {strides = array<i32>} : memref<16x128xf32, #tpu.memory_space<vmem>>, vector<16x128xf32>,
    %c0_i32_12 = arith.constant 0 : i32
    %23 = arith.cmpi eq, %arg1, %c0_i32_12 : i32
    %24 = arith.extui %23 : i1 to i32
    %c0_i32_13 = arith.constant 0 : i32
    %25 = arith.cmpi ne, %24, %c0_i32_13 : i32
    scf.if %25 {
      %c0_14 = arith.constant 0 : index
      %c0_15 = arith.constant 0 : index
      %26 = vector.load %arg5[%c0_14, %c0_15] : memref<16x128xf32, #tpu.memory_space<vmem>>, vector<16x128xf32>
      %cst_16 = arith.constant dense<0.000000e+00> : vector<128xf32>
      %27 = vector.multi_reduction <add>, %26, %cst_16 [0] : vector<16x128xf32> to vector<128xf32>
      %28 = vector.shape_cast %27 : vector<128xf32> to vector<1x128xf32>
      %29 = vector.shape_cast %28 : vector<1x128xf32> to vector<1x1x128xf32>
      %c0_17 = arith.constant 0 : index
      %c0_18 = arith.constant 0 : index
      %c0_19 = arith.constant 0 : index
      %30 = vector.load %arg4[%c0_17, %c0_18, %c0_19] : memref<1x1x128xf32, #tpu.memory_space<vmem>>, vector<1x1x128xf32>
      tpu.vector_store %arg4[%c0_17, %c0_18, %c0_19], %29 {strides = array<i32>} : memref<1x1x128xf32, #tpu.memory_space<vmem>>, vector<1x1x128xf32>,
    } else {
    }
    return
  }
  func.func @transform_0(%arg0: i32, %arg1: i32) -> (i32, i32) {
    %c1_i32 = arith.constant 1 : i32
    %0 = arith.muli %arg0, %c1_i32 : i32
    %1 = arith.addi %0, %arg1 : i32
    %c0_i32 = arith.constant 0 : i32
    %c0_i32_0 = arith.constant 0 : i32
    return %1, %c0_i32 : i32, i32
  }
  func.func @transform_1(%arg0: i32, %arg1: i32) -> (i32, i32) {
    %c1_i32 = arith.constant 1 : i32
    %0 = arith.muli %arg0, %c1_i32 : i32
    %1 = arith.addi %0, %arg1 : i32
    %c0_i32 = arith.constant 0 : i32
    %c0_i32_0 = arith.constant 0 : i32
    return %1, %c0_i32 : i32, i32
  }
  func.func @transform_2(%arg0: i32, %arg1: i32) -> (i32, i32, i32) {
    %c0_i32 = arith.constant 0 : i32
    %c0_i32_0 = arith.constant 0 : i32
    %c0_i32_1 = arith.constant 0 : i32
    return %arg0, %c0_i32, %c0_i32_0 : i32, i32, i32
  }
}

</mosaic_0001>

<llo_original>
// kernel: bce_loss.1
$region0: #{bce_loss.1}
  #allocation0 [shape = 'u32[]', space=smem, size = 0x4, offset = 0x4, fixed_abs, tag = 'smem constant byte address 0x4 - core index']
  #allocation1 [shape = 'u32[144,128]{1,0:T(1,128)}', space=vmem, size = 0x12000, scoped, tag = 'internal scratch']
  #allocation2 [shape = 'f32[16,128]{1,0:T(8,128)}', space=vmem, size = 0x2000, scoped, tag = 'scratch operand']
  %s0 = inlined_call_operand.vmem [shape: f32[16,128], index: 0, kind: input, shape index: {}]
  %s1 = inlined_call_operand.vmem [shape: f32[16,128], index: 1, kind: input, shape index: {}]
  %s2 = inlined_call_operand.vmem [shape: f32[1,1,128], index: 2, kind: output, shape index: {}]
  %s3 = sld [smem:[#allocation0]]
  $region26: #{bce_loss.1} parent=0
    _
  %s5 = ssub.s32 1, %s3
  %s6 = scalar_select 0, %s5, %s3
  // Predicated region
  $region2: #{bce_loss.1} parent=0 // pred_check
    _
  $region3: #{bce_loss.1} parent=0 // pred_check_branch
    %8 = sbr.rel (0) target = $region5
  $region4: #{bce_loss.1} parent=0 // pred_region
    %s9 = sadd.s32 0, 0
    %s10 = smul.u32 2, %s9
    %p11 = scmp.lt.s32.totalorder %s10, 1
    %s12 = scalar_select %p11, %s10, 1
    %s13 = smul.addr %s12, 8
    %s14 = scalar_lea.vmem %s0, %s13
    %s15 = sadd.s32 0, 0
    %s16 = smul.u32 2, %s15
  $region5: #{bce_loss.1} parent=0 // pred_fallthru
    _
  // Predicated region
  $region6: #{bce_loss.1} parent=0 // pred_check
    _
  $region7: #{bce_loss.1} parent=0 // pred_check_branch
    %18 = sbr.rel (0) target = $region9
  $region8: #{bce_loss.1} parent=0 // pred_region
    %s19 = sadd.s32 0, 0
    %s20 = smul.u32 2, %s19
    %p21 = scmp.lt.s32.totalorder %s20, 1
    %s22 = scalar_select %p21, %s20, 1
    %s23 = smul.addr %s22, 8
    %s24 = scalar_lea.vmem %s1, %s23
    %s25 = sadd.s32 0, 0
    %s26 = smul.u32 2, %s25
  $region9: #{bce_loss.1} parent=0 // pred_fallthru
    _
  %s27 = sadd.s32 0, 0
  %s28 = smul.u32 2, %s27
  %p29 = scmp.lt.s32.totalorder %s28, 1
  %s30 = scalar_select %p29, %s28, 1
  %s31 = smul.addr %s30, 8
  %s32 = scalar_lea.vmem %s0, %s31
  %s33 = sadd.s32 0, 0
  %s34 = smul.u32 2, %s33
  %p35 = scmp.lt.s32.totalorder %s34, 1
  %s36 = scalar_select %p35, %s34, 1
  %s37 = smul.addr %s36, 8
  %s38 = scalar_lea.vmem %s1, %s37
  %s39 = sadd.s32 0, 0
  %s40 = smul.u32 2, %s39
  %p41 = scmp.lt.s32.totalorder %s40, 1
  %s42 = scalar_select %p41, %s40, 1
  %s43 = smul.addr %s42, 8
  %s44 = scalar_lea.vmem %s0, %s43
  %s45 = sadd.s32 0, 0
  %s46 = smul.u32 2, %s45
  %s47 = sadd.s32 0, 0
  %s48 = smul.u32 2, %s47
  %p49 = scmp.lt.s32.totalorder %s48, 1
  %s50 = scalar_select %p49, %s48, 1
  %s51 = smul.addr %s50, 8
  %s52 = scalar_lea.vmem %s1, %s51
  %s53 = sadd.s32 0, 0
  %s54 = smul.u32 2, %s53
  %p55 = scmp.eq.s32.totalorder 0, 0
  // Predicated region
  $region10: #{bce_loss.1} parent=0 // pred_check
    %p56 = pneg %p55
  $region11: #{bce_loss.1} parent=0 // pred_check_branch
    %58 = sbr.rel (%p56) target = $region13
  $region12: #{bce_loss.1} parent=0 // pred_region
    %59 = vst [vmem:[#allocation2] sm:$0xff] 0.0
    %60 = vst [vmem:[#allocation2 + $0x8] sm:$0xff] 0.0
  $region13: #{bce_loss.1} parent=0 // pred_fallthru
    _
  %v61 = vld [vmem:[%s44] sm:$0xff]
  %v62 = vld [vmem:[%s44 + $0x8] sm:$0xff]
  %v63 = vld [vmem:[%s52] sm:$0xff]
  %v64 = vld [vmem:[%s52 + $0x8] sm:$0xff]
  %v65 = vlog2.pop %v61
  %v66 = vmul.f32 %v65, 0.6931472
  %v67 = vlog2.pop %v62
  %v68 = vmul.f32 %v67, 0.6931472
  %v69 = vmax.f32 %v66, -100.0
  %v70 = vmax.f32 %v68, -100.0
  %v71 = vsub.f32 1.0, %v61
  %v72 = vsub.f32 1.0, %v62
  %v73 = vlog2.pop %v71
  %v74 = vmul.f32 %v73, 0.6931472
  %v75 = vlog2.pop %v72
  %v76 = vmul.f32 %v75, 0.6931472
  %v77 = vmax.f32 %v74, -100.0
  %v78 = vmax.f32 %v76, -100.0
  %v79 = vmul.f32 %v63, %v69
  %v80 = vmul.f32 %v64, %v70
  %v81 = vsub.f32 1.0, %v63
  %v82 = vsub.f32 1.0, %v64
  %v83 = vmul.f32 %v81, %v77
  %v84 = vmul.f32 %v82, %v78
  %v85 = vadd.f32 %v79, %v83
  %v86 = vadd.f32 %v80, %v84
  %v87 = vsub.f32 0.0, %v85
  %v88 = vsub.f32 0.0, %v86
  %v89 = vld [vmem:[#allocation2] sm:$0xff]
  %v90 = vld [vmem:[#allocation2 + $0x8] sm:$0xff]
  %v91 = vadd.f32 %v89, %v87
  %v92 = vadd.f32 %v90, %v88
  %93 = vst [vmem:[#allocation2] sm:$0xff] %v91
  %94 = vst [vmem:[#allocation2 + $0x8] sm:$0xff] %v92
  // Predicated region
  $region14: #{bce_loss.1} parent=0 // pred_check
    %p95 = pneg %p55
  $region15: #{bce_loss.1} parent=0 // pred_check_branch
    %97 = sbr.rel (%p95) target = $region17
  $region16: #{bce_loss.1} parent=0 // pred_region
    %v98 = vld [vmem:[#allocation2] sm:$0xff]
    %v99 = vld [vmem:[#allocation2 + $0x8] sm:$0xff]
    %v100 = vadd.f32 %v98, %v99
    %v101 = vrot.slane %v100, 4
    %v102 = vadd.f32 %v100, %v101
    %v103 = vrot.slane %v102, 2
    %v104 = vadd.f32 %v102, %v103
    %v105 = vrot.slane %v104, 1
    %v106 = vadd.f32 %v104, %v105
    %107 = vst [vmem:[%s2] sm:$0x1] %v106
  $region17: #{bce_loss.1} parent=0 // pred_fallthru
    _
  // Predicated region
  $region18: #{bce_loss.1} parent=0 // pred_check
    _
  $region19: #{bce_loss.1} parent=0 // pred_check_branch
    %109 = sbr.rel (0) target = $region21
  $region20: #{bce_loss.1} parent=0 // pred_region
    _
  $region21: #{bce_loss.1} parent=0 // pred_fallthru
    _
  // Predicated region
  $region22: #{bce_loss.1} parent=0 // pred_check
    _
  $region23: #{bce_loss.1} parent=0 // pred_check_branch
    %111 = sbr.rel (0) target = $region25
  $region24: #{bce_loss.1} parent=0 // pred_region
    _
  $region25: #{bce_loss.1} parent=0 // pred_fallthru
    _

</llo_original>
